<compile_context>
chip_gen: v7x
topology: tpu7x:2x2x1
jax: 0.10.0
libtpu: 0.0.40
codegen_flags: <defaults>
</compile_context>

<pallas_src>
import functools

import jax
import jax.numpy as jnp
from jax import lax
from jax.experimental import pallas as pl
from jax.experimental.pallas import tpu as pltpu


def _round_up(x, m):
    return ((x + m - 1) // m) * m


def _round_down(x, m):
    return (x // m) * m


def _sublane(dtype):
    """Packed-sublane alignment for the second-to-last block dim."""
    return 8 * (4 // jnp.dtype(dtype).itemsize)


def _vmem_budget_bytes():
    """Usable VMEM per TensorCore (generation-aware, with headroom)."""
    try:
        cap = int(pltpu.get_tpu_info().vmem_capacity_bytes)
    except Exception:
        cap = 64 << 20          # conservative fallback (v7x per-core VMEM)
    return max(cap - (8 << 20), 24 << 20)


# ---------------------------------------------------------------------------
# Kernels
# ---------------------------------------------------------------------------
def _linear_full_k_kernel(x_ref, w_ref, b_ref, y_ref):
    """y = x @ w + b with the full K dim in one block (small / resident paths)."""
    acc = jnp.dot(x_ref[...], w_ref[...], preferred_element_type=jnp.float32)
    y_ref[...] = (acc + b_ref[...]).astype(y_ref.dtype)


def _tiled_matmul_kernel(x_ref, w_ref, b_ref, y_ref, acc_ref, *,
                         k_true, tk, need_k_mask):
    """One (tm, tn) output tile accumulated over the K grid axis."""
    k_step = pl.program_id(2)

    @pl.when(k_step == 0)
    def _():
        acc_ref[...] = jnp.zeros_like(acc_ref)

    x = x_ref[...]
    if need_k_mask:
        # x is NOT padded along K, so the last K tile reads past the true K.
        # Zero those columns explicitly (w IS zero-padded there, but garbage x
        # could decode as NaN/Inf and NaN * 0 = NaN would poison the acc).
        col = k_step * tk + lax.broadcasted_iota(jnp.int32, x.shape, 1)
        x = jnp.where(col < k_true, x, jnp.zeros_like(x))

    acc_ref[...] += jnp.dot(x, w_ref[...], preferred_element_type=jnp.float32)

    @pl.when(k_step == pl.num_programs(2) - 1)
    def _():
        # Bias in the epilogue: one lane-wise vadd fused with the final cast.
        y_ref[...] = (acc_ref[...] + b_ref[...]).astype(y_ref.dtype)


# ---------------------------------------------------------------------------
# Wrapper
# ---------------------------------------------------------------------------
def _linear_pallas(x2d, w, b, *, compute_dtype=jnp.bfloat16,
                   tm=256, tn=512, tk=1024, _path="auto"):
    """x2d: (M, K), w: (K, N), b: (N,) -> (M, N)."""
    M, K = x2d.shape
    Kw, N = w.shape
    assert K == Kw, (K, Kw)
    assert b.shape == (N,), (b.shape, N)

    out_dtype = x2d.dtype
    cdt = jnp.dtype(out_dtype if compute_dtype is None else compute_dtype)
    if x2d.dtype != cdt:
        x2d = x2d.astype(cdt)
    if w.dtype != cdt:
        w = w.astype(cdt)
    b32 = b.astype(jnp.float32)        # bias stays f32 (added to the f32 acc)

    c_item = cdt.itemsize
    o_item = jnp.dtype(out_dtype).itemsize
    sub = _sublane(cdt)
    budget = _vmem_budget_bytes()

    Kr = _round_up(K, 128)             # lane-rounded K (VMEM footprint)
    Np = _round_up(N, 128)             # lane-dense output width
    flops = 2 * M * K * N

    # ---------------- small path: one block, no padding at all --------------
    small_bytes = ((M * Kr + Kr * Np) * c_item          # x, w
                   + M * Np * (o_item + 4)              # y + f32 intermediate
                   + Np * 4)                            # bias
    if _path == "small" or (_path == "auto" and small_bytes <= (2 << 20)):
        return pl.pallas_call(
            _linear_full_k_kernel,
            out_shape=jax.ShapeDtypeStruct((M, N), out_dtype),
            grid_spec=pltpu.PrefetchScalarGridSpec(
                num_scalar_prefetch=0,
                grid=(1,),
                in_specs=[
                    pl.BlockSpec((M, K), lambda i: (0, 0)),
                    pl.BlockSpec((K, N), lambda i: (0, 0)),
                    pl.BlockSpec((1, N), lambda i: (0, 0)),
                ],
                out_specs=pl.BlockSpec((M, N), lambda i: (0, 0)),
            ),
            compiler_params=pltpu.CompilerParams(
                dimension_semantics=("arbitrary",)),
            cost_estimate=pl.CostEstimate(
                flops=flops, transcendentals=0,
                bytes_accessed=(M * K + K * N + N) * c_item + M * N * o_item),
        )(x2d, w, b32.reshape(1, N))

    pad_n = Np - N

    # ------------- weights-resident path: DMA w once, stream x once ---------
    # Conservative footprint: w/b (double-buffered) + per-M-row streaming cost.
    w_res_bytes = 2 * Kr * Np * c_item + 2 * 8 * Np * 4
    per_row = 2 * Kr * c_item + 2 * Np * o_item + Np * 4
    max_tm = (budget - w_res_bytes) // per_row if budget > w_res_bytes else 0
    if _path == "resident" or (_path == "auto" and max_tm >= sub):
        tm_r = max(sub, _round_down(min(tm, max(max_tm, sub)), sub))
        if tm_r >= M:
            tm_r = M
        # v7x megacore: make sure both TensorCores get at least one M tile.
        if pl.cdiv(M, tm_r) < 2 and M >= 2 * sub:
            tm_r = _round_up(pl.cdiv(M, 2), sub)
        wp = jnp.pad(w, ((0, 0), (0, pad_n))) if pad_n else w
        bp = (jnp.pad(b32, (0, pad_n)) if pad_n else b32).reshape(1, Np)
        need = w_res_bytes + tm_r * per_row
        vmem_limit = int(min(budget, max(need + (4 << 20), 32 << 20)))
        y = pl.pallas_call(
            _linear_full_k_kernel,
            out_shape=jax.ShapeDtypeStruct((M, Np), out_dtype),
            grid_spec=pltpu.PrefetchScalarGridSpec(
                num_scalar_prefetch=0,
                grid=(pl.cdiv(M, tm_r),),
                in_specs=[
                    pl.BlockSpec((tm_r, K), lambda i: (i, 0)),  # x: streamed once
                    pl.BlockSpec((K, Np), lambda i: (0, 0)),    # w: resident
                    pl.BlockSpec((1, Np), lambda i: (0, 0)),    # b: resident
                ],
                out_specs=pl.BlockSpec((tm_r, Np), lambda i: (i, 0)),
            ),
            compiler_params=pltpu.CompilerParams(
                dimension_semantics=("parallel",),
                vmem_limit_bytes=vmem_limit),
            cost_estimate=pl.CostEstimate(
                flops=2 * M * K * Np, transcendentals=0,
                bytes_accessed=(M * K + K * Np) * c_item
                               + M * Np * o_item + Np * 4),
        )(x2d, wp, bp)
        return y[:, :N] if pad_n else y

    # --------------- general tiled path: 3-D grid, f32 accumulator ----------
    tm_t = max(sub, _round_down(min(tm, _round_up(M, sub)), sub))
    if tm_t >= M:
        tm_t = M
    tn_t = max(128, _round_down(min(tn, Np), 128))
    tk_t = max(128, _round_down(min(tk, Kr), 128))
    # v7x megacore: keep >= 2 tiles on the parallel axes when possible.
    if pl.cdiv(M, tm_t) * pl.cdiv(Np, tn_t) < 2 and M >= 2 * sub:
        tm_t = _round_up(pl.cdiv(M, 2), sub)

    nk = pl.cdiv(K, tk_t)
    pad_k = nk * tk_t - K
    # The activation is never padded (that would be an extra full HBM pass);
    # only the small weight/bias are zero-padded, with one combined jnp.pad.
    if pad_k or pad_n:
        w = jnp.pad(w, ((0, pad_k), (0, pad_n)))
    bp = (jnp.pad(b32, (0, pad_n)) if pad_n else b32).reshape(1, Np)

    kernel = functools.partial(
        _tiled_matmul_kernel, k_true=K, tk=tk_t, need_k_mask=(K % tk_t != 0))

    needed = (2 * (tm_t * tk_t + tk_t * tn_t) * c_item
              + 2 * tm_t * tn_t * o_item + tm_t * tn_t * 4 + 2 * 8 * tn_t * 4)
    vmem_limit = int(min(budget, max(needed + (8 << 20), 32 << 20)))

    y = pl.pallas_call(
        kernel,
        out_shape=jax.ShapeDtypeStruct((M, Np), out_dtype),
        grid_spec=pltpu.PrefetchScalarGridSpec(
            num_scalar_prefetch=0,
            grid=(pl.cdiv(M, tm_t), pl.cdiv(Np, tn_t), nk),
            in_specs=[
                pl.BlockSpec((tm_t, tk_t), lambda i, j, k: (i, k)),  # x tile
                pl.BlockSpec((tk_t, tn_t), lambda i, j, k: (k, j)),  # w tile
                pl.BlockSpec((1, tn_t), lambda i, j, k: (0, j)),     # bias tile
            ],
            out_specs=pl.BlockSpec((tm_t, tn_t), lambda i, j, k: (i, j)),
            scratch_shapes=[pltpu.VMEM((tm_t, tn_t), jnp.float32)],
        ),
        compiler_params=pltpu.CompilerParams(
            dimension_semantics=("parallel", "parallel", "arbitrary"),
            vmem_limit_bytes=vmem_limit),
        cost_estimate=pl.CostEstimate(
            flops=2 * M * (K + pad_k) * Np, transcendentals=0,
            bytes_accessed=(M * (K + pad_k) + (K + pad_k) * Np) * c_item
                           + M * Np * o_item),
    )(x2d, w, bp)
    return y[:, :N] if pad_n else y


def time_distributed_linear(x, w, b, *, compute_dtype=jnp.bfloat16,
                            tm=256, tn=512, tk=1024):
    """Pallas implementation of TimeDistributed(nn.Linear(K, N)).forward(x).

    x: (t, n, K)  or  (M, K) / (K,)   (the <=2D branch of the PyTorch module)
    w: (K, N)   (PyTorch stores Linear weight as (N, K); pass it transposed)
    b: (N,)

    By default operands are cast to bfloat16 (accumulation stays float32 in
    VMEM); pass compute_dtype=jnp.float32 (or None) for exact-f32 compute.
    """
    if x.ndim <= 2:
        x2d = x if x.ndim == 2 else x.reshape(1, -1)
        y = _linear_pallas(x2d, w, b, compute_dtype=compute_dtype,
                           tm=tm, tn=tn, tk=tk)
        return y if x.ndim == 2 else y.reshape(-1)

    t, n = x.shape[0], x.shape[1]
    x2d = x.reshape(t * n, x.shape[2])            # glue: view(t*n, features)
    y2d = _linear_pallas(x2d, w, b, compute_dtype=compute_dtype,
                         tm=tm, tn=tn, tk=tk)
    return y2d.reshape(t, n, -1)                  # glue: view(t, n, out_features)


if __name__ == "__main__":
    key = jax.random.PRNGKey(0)
    kx, kw, kb, kx2 = jax.random.split(key, 4)

    # Shapes implied by the forward: x is (time, batch, features).
    T, NB, IN_F, OUT_F = 8, 2, 32, 64
    x = jax.random.normal(kx, (T, NB, IN_F), dtype=jnp.float32)
    w = jax.random.normal(kw, (IN_F, OUT_F), dtype=jnp.float32) * 0.05
    b = jax.random.normal(kb, (OUT_F,), dtype=jnp.float32) * 0.05

    ref3d = (x.reshape(T * NB, IN_F) @ w + b).reshape(T, NB, OUT_F)

    # 3-D TimeDistributed branch (default bf16 compute, f32 accumulate).
    y = jax.block_until_ready(time_distributed_linear(x, w, b))
    assert y.shape == (T, NB, OUT_F)
    assert jnp.allclose(y, ref3d, atol=3e-2, rtol=3e-2)

    # <=2-D passthrough branch.
    x2 = x[0]                                    # (NB, IN_F)
    y2 = jax.block_until_ready(time_distributed_linear(x2, w, b))
    assert jnp.allclose(y2, x2 @ w + b, atol=3e-2, rtol=3e-2)

    # Exercise every kernel path (small / weights-resident / tiled with the
    # in-kernel K-tail mask) at small shapes, in both compute dtypes.
    x2d = x.reshape(T * NB, IN_F)
    ref2d = x2d @ w + b
    for cdt, tol in ((jnp.float32, 1e-4), (jnp.bfloat16, 3e-2)):
        for path in ("small", "resident", "tiled"):
            yp = jax.block_until_ready(
                _linear_pallas(x2d, w, b, compute_dtype=cdt, _path=path))
            assert yp.shape == ref2d.shape, (cdt, path)
            assert jnp.allclose(yp, ref2d, atol=tol, rtol=tol), (cdt, path)

    # A modestly larger case that takes the weights-resident path on "auto",
    # with a non-128-multiple K and a padded N.
    T2, NB2, K2, N2 = 64, 16, 200, 192
    xb = jax.random.normal(kx2, (T2, NB2, K2), dtype=jnp.float32)
    kw2, kb2 = jax.random.split(kw)
    w2 = jax.random.normal(kw2, (K2, N2), dtype=jnp.float32) * 0.05
    b2 = jax.random.normal(kb2, (N2,), dtype=jnp.float32) * 0.05
    yb = jax.block_until_ready(time_distributed_linear(xb, w2, b2))
    refb = (xb.reshape(T2 * NB2, K2) @ w2 + b2).reshape(T2, NB2, N2)
    assert yb.shape == refb.shape
    assert jnp.allclose(yb, refb, atol=5e-2, rtol=5e-2)

    print("KERNEL_OK")
</pallas_src>

<mosaic_0001>
module attributes {stable_mosaic.version = 11 : i64} {
  func.func @_linear_full_k_kernel(%arg0: i32, %arg1: memref<16x32xbf16, #tpu.memory_space<vmem>>, %arg2: memref<32x64xbf16, #tpu.memory_space<vmem>>, %arg3: memref<1x64xf32, #tpu.memory_space<vmem>>, %arg4: memref<16x64xf32, #tpu.memory_space<vmem>>) attributes {dimension_semantics = [#tpu.dimension_semantics<arbitrary>], iteration_bounds = array<i64: 1>, scalar_prefetch = 0 : i64, scratch_operands = 0 : i64, tpu.core_type = #tpu.core_type<tc>, window_params = [{pipeline_mode = #tpu.pipeline_mode<synchronous>, transform_indices = @transform_0, window_bounds = array<i64: 16, 32>}, {pipeline_mode = #tpu.pipeline_mode<synchronous>, transform_indices = @transform_1, window_bounds = array<i64: 32, 64>}, {pipeline_mode = #tpu.pipeline_mode<synchronous>, transform_indices = @transform_2, window_bounds = array<i64: 1, 64>}, {pipeline_mode = #tpu.pipeline_mode<synchronous>, transform_indices = @transform_3, window_bounds = array<i64: 16, 64>}]} {
    %c0 = arith.constant 0 : index
    %c0_0 = arith.constant 0 : index
    %0 = vector.load %arg1[%c0, %c0_0] : memref<16x32xbf16, #tpu.memory_space<vmem>>, vector<16x32xbf16>
    %c0_1 = arith.constant 0 : index
    %c0_2 = arith.constant 0 : index
    %1 = vector.load %arg2[%c0_1, %c0_2] : memref<32x64xbf16, #tpu.memory_space<vmem>>, vector<32x64xbf16>
    %cst = arith.constant dense<0.000000e+00> : vector<16x64xf32>
    %2 = tpu.matmul %0, %1, %cst {dimension_numbers = #tpu.dot_dimension_numbers<[1], [0], [0], [1], [0, 0, 1, 1], [], []>} : vector<16x32xbf16>, vector<32x64xbf16>, vector<16x64xf32> -> vector<16x64xf32>
    %c0_3 = arith.constant 0 : index
    %c0_4 = arith.constant 0 : index
    %3 = vector.load %arg3[%c0_3, %c0_4] : memref<1x64xf32, #tpu.memory_space<vmem>>, vector<1x64xf32>
    %4 = vector.broadcast %3 : vector<1x64xf32> to vector<16x64xf32>
    %5 = arith.addf %2, %4 : vector<16x64xf32>
    %c0_5 = arith.constant 0 : index
    %c0_6 = arith.constant 0 : index
    %6 = vector.load %arg4[%c0_5, %c0_6] : memref<16x64xf32, #tpu.memory_space<vmem>>, vector<16x64xf32>
    tpu.vector_store %arg4[%c0_5, %c0_6], %5 {strides = array<i32>} : memref<16x64xf32, #tpu.memory_space<vmem>>, vector<16x64xf32>,
    return
  }
  func.func @transform_0(%arg0: i32) -> (i32, i32) {
    %c0_i32 = arith.constant 0 : i32
    %c0_i32_0 = arith.constant 0 : i32
    %c0_i32_1 = arith.constant 0 : i32
    return %c0_i32, %c0_i32_0 : i32, i32
  }
  func.func @transform_1(%arg0: i32) -> (i32, i32) {
    %c0_i32 = arith.constant 0 : i32
    %c0_i32_0 = arith.constant 0 : i32
    %c0_i32_1 = arith.constant 0 : i32
    return %c0_i32, %c0_i32_0 : i32, i32
  }
  func.func @transform_2(%arg0: i32) -> (i32, i32) {
    %c0_i32 = arith.constant 0 : i32
    %c0_i32_0 = arith.constant 0 : i32
    %c0_i32_1 = arith.constant 0 : i32
    return %c0_i32, %c0_i32_0 : i32, i32
  }
  func.func @transform_3(%arg0: i32) -> (i32, i32) {
    %c0_i32 = arith.constant 0 : i32
    %c0_i32_0 = arith.constant 0 : i32
    %c0_i32_1 = arith.constant 0 : i32
    return %c0_i32, %c0_i32_0 : i32, i32
  }
}

</mosaic_0001>

<llo_original>
// kernel: tpu_custom_call.1
$region0: #{tpu_custom_call.1}
  #allocation0 [shape = 'u32[]', space=smem, size = 0x4, offset = 0x4, fixed_abs, tag = 'smem constant byte address 0x4 - core index']
  #allocation1 [shape = 'u32[144,128]{1,0:T(1,128)}', space=vmem, size = 0x12000, scoped, tag = 'internal scratch']
  %s0 = inlined_call_operand.hbm [shape: bf16[16,32], index: 0, kind: input, shape index: {}]
  %s1 = inlined_call_operand.hbm [shape: bf16[32,64], index: 1, kind: input, shape index: {}]
  %s2 = inlined_call_operand.vmem [shape: f32[1,64], index: 2, kind: input, shape index: {}]
  %s3 = inlined_call_operand.hbm [shape: f32[16,64], index: 3, kind: output, shape index: {}]
  %s4 = sld [smem:[#allocation0]]
  $region30: #{tpu_custom_call.1} parent=0
    _
  %s6 = ssub.s32 1, %s4
  %s7 = scalar_select 0, %s6, %s4
  $region1: #{tpu_custom_call.1} parent=0
    #allocation2 [shape = 'u8[4096]{0}', space=vmem, size = 0x1000, scoped, tag = 'input window, operand 0, single buffered']
    #allocation3 [shape = 's32[1]{0}', space=sflag, size = 0x4, scoped, tag = 'scoped memory for tpu_custom_call.1']
    #allocation4 [shape = 's32[1]{0}', space=sflag, size = 0x4, scoped, tag = 'scoped memory for tpu_custom_call.1']
    #allocation5 [shape = 'u8[8192]{0}', space=vmem, size = 0x2000, scoped, tag = 'input window, operand 1, single buffered']
    #allocation6 [shape = 's32[1]{0}', space=sflag, size = 0x4, scoped, tag = 'scoped memory for tpu_custom_call.1']
    #allocation7 [shape = 'u8[8192]{0}', space=vmem, size = 0x2000, scoped, tag = 'output window, operand 0, single buffered']
    %8 = vsyncpa [#allocation3], 0
    %9 = vsyncpa [#allocation6], 0
    %10 = vsyncpa [#allocation4], 0
    // Predicated region
    $region2: #{tpu_custom_call.1} parent=1 // pred_check
      _
    $region3: #{tpu_custom_call.1} parent=1 // pred_check_branch
      %12 = sbr.rel (0) target = $region5
    $region4: #{tpu_custom_call.1} parent=1 // pred_region
      %s14 = ssub.s32 128, 128
      %15 = vsyncadd [#allocation3], %s14
      %s16 = sshll.u32 [#allocation2], 4
      %s17 = int_to_ptr.vmem [resolvable:$true] %s16
      %22 = dma.hbm_to_vmem [thread:$0]  %s0, 128, %s17, [#allocation3], 64, 64, 4
    $region5: #{tpu_custom_call.1} parent=1 // pred_fallthru
      _
    // Predicated region
    $region6: #{tpu_custom_call.1} parent=1 // pred_check
      _
    $region7: #{tpu_custom_call.1} parent=1 // pred_check_branch
      %24 = sbr.rel (0) target = $region9
    $region8: #{tpu_custom_call.1} parent=1 // pred_region
      %s26 = ssub.s32 256, 256
      %27 = vsyncadd [#allocation6], %s26
      %s28 = sshll.u32 [#allocation5], 4
      %s29 = int_to_ptr.vmem [resolvable:$true] %s28
      %34 = dma.hbm_to_vmem [thread:$0]  %s1, 256, %s29, [#allocation6], 64, 64, 4
    $region9: #{tpu_custom_call.1} parent=1 // pred_fallthru
      _
    // Predicated region
    $region10: #{tpu_custom_call.1} parent=1 // pred_check
      _
    $region11: #{tpu_custom_call.1} parent=1 // pred_check_branch
      %36 = sbr.rel (0) target = $region13
    $region12: #{tpu_custom_call.1} parent=1 // pred_region
      _
    $region13: #{tpu_custom_call.1} parent=1 // pred_fallthru
      _
    // Predicated region
    $region14: #{tpu_custom_call.1} parent=1 // pred_check
      _
    $region15: #{tpu_custom_call.1} parent=1 // pred_check_branch
      %38 = sbr.rel (0) target = $region17
    $region16: #{tpu_custom_call.1} parent=1 // pred_region
      %39 = dma.done [#allocation3], 128
    $region17: #{tpu_custom_call.1} parent=1 // pred_fallthru
      _
    // Predicated region
    $region18: #{tpu_custom_call.1} parent=1 // pred_check
      _
    $region19: #{tpu_custom_call.1} parent=1 // pred_check_branch
      %41 = sbr.rel (0) target = $region21
    $region20: #{tpu_custom_call.1} parent=1 // pred_region
      %42 = dma.done [#allocation6], 256
    $region21: #{tpu_custom_call.1} parent=1 // pred_fallthru
      _
    %v44 = vld [vmem:[#allocation2] sm:$0xf]
    %v45 = vld [vmem:[#allocation2 + $0x4] sm:$0xf]
    %v46 = vld [vmem:[#allocation5] sm:$0xf]
    %v47 = vld [vmem:[#allocation5 + $0x4] sm:$0xf]
    %v48 = vld [vmem:[#allocation5 + $0x8] sm:$0xf]
    %v49 = vld [vmem:[#allocation5 + $0xc] sm:$0xf]
    %v50 = vld [vmem:[%s2] sm:$0x1]
    %v52 = vlaneseq
    %v53 = vshrl.u32 %v52, 7
    %v54 = vsub.s32 0, %v53
    %v55 = vrot.slane %v50, %v54
    %v59 = vunpack.c.l.b16 %v44
    %v60 = vunpack.c.l.b16 %v45
    %v61 = vpack.c.b16 %v60, %v59
    %v66 = vunpack.c.l.b16 %v46
    %v67 = vunpack.c.l.b16 %v47
    %v68 = vunpack.c.l.b16 %v48
    %v69 = vunpack.c.l.b16 %v49
    %v70 = vpack.c.b16 %v67, %v66
    %v71 = vpack.c.b16 %v69, %v68
    %vm74 = vcmask 261120
    %v76 = vsel %vm74, %v61, 0
    %78 = vmatprep.subr.bf16.mxu0 0
    %79 = vmatpush1.bf16.msra.mxu0 %v70
    %80 = vmatprep.subr.bf16.mxu0 0
    %81 = vmatpush1.bf16.msra.mxu0 %v71
    %82 = vmatprep.subr.bf16.mxu0 0
    %83 = vmatpush1.bf16.msra.mxu0 0
    %84 = vmatprep.subr.bf16.mxu0 0
    %85 = vmatpush1.bf16.msra.mxu0 0
    %86 = vmatprep.subr.bf16.mxu0 0
    %87 = vmatpush1.bf16.msra.mxu0 0
    %88 = vmatprep.subr.bf16.mxu0 0
    %89 = vmatpush1.bf16.msra.mxu0 0
    %90 = vmatprep.subr.bf16.mxu0 0
    %91 = vmatpush1.bf16.msra.mxu0 0
    %92 = vmatprep.subr.bf16.mxu0 0
    %93 = vmatpush1.bf16.msra.mxu0 0
    %94 = vmatprep.subr.bf16.mxu0 0
    %95 = vmatpush1.bf16.msra.mxu0 0
    %96 = vmatprep.subr.bf16.mxu0 0
    %97 = vmatpush1.bf16.msra.mxu0 0
    %98 = vmatprep.subr.bf16.mxu0 0
    %99 = vmatpush1.bf16.msra.mxu0 0
    %100 = vmatprep.subr.bf16.mxu0 0
    %101 = vmatpush1.bf16.msra.mxu0 0
    %102 = vmatprep.subr.bf16.mxu0 0
    %103 = vmatpush1.bf16.msra.mxu0 0
    %104 = vmatprep.subr.bf16.mxu0 0
    %105 = vmatpush1.bf16.msra.mxu0 0
    %106 = vmatprep.subr.bf16.mxu0 0
    %107 = vmatpush1.bf16.msra.mxu0 0
    %108 = vmatprep.subr.bf16.mxu0 0
    %109 = vmatpush1.bf16.msra.mxu0 0
    %110 = vmatprep.mubr.bf16.mxu0 0
    %111 = vmatmul.mubr.bf16.gmra.mrb[0].mxu0 %v76
    %v112 = vpop.f32.mrb[0].mxu0
    %v113 = vadd.f32 %v55, %v112
    %v114 = vpop.f32.mrb[0].mxu0
    %v115 = vpop.f32.mrb[0].mxu0
    %v116 = vadd.f32 %v55, %v115
    %v117 = vpop.f32.mrb[0].mxu0
    %118 = vdwg.mxu0
    %vm119 = vcmask 523264
    %120 = vst.msk [vmem:[#allocation7] sm:$0xff] %vm119, %v113
    %121 = vst.msk [vmem:[#allocation7 + $0x8] sm:$0xff] %vm119, %v116
    // Predicated region
    $region22: #{tpu_custom_call.1} parent=1 // pred_check
      _
    $region23: #{tpu_custom_call.1} parent=1 // pred_check_branch
      %123 = sbr.rel (0) target = $region25
    $region24: #{tpu_custom_call.1} parent=1 // pred_region
      %s125 = ssub.s32 256, 256
      %126 = vsyncadd [#allocation4], %s125
      %s127 = sshll.u32 [#allocation7], 4
      %s128 = int_to_ptr.vmem [resolvable:$true] %s127
      %133 = dma.vmem_to_hbm [thread:$0]  %s128, 256, %s3, [#allocation4], 128, 128, 8
    $region25: #{tpu_custom_call.1} parent=1 // pred_fallthru
      _
    // Predicated region
    $region26: #{tpu_custom_call.1} parent=1 // pred_check
      _
    $region27: #{tpu_custom_call.1} parent=1 // pred_check_branch
      %135 = sbr.rel (0) target = $region29
    $region28: #{tpu_custom_call.1} parent=1 // pred_region
      %136 = dma.done [#allocation4], 256
    $region29: #{tpu_custom_call.1} parent=1 // pred_fallthru
      _
    %137 = vsyncpa [#allocation3], 1
    %138 = vsyncpa [#allocation6], 1
    %139 = vsyncpa [#allocation4], 1

</llo_original>
